<compile_context>
chip_gen: v7x
topology: tpu7x:2x2x1
jax: 0.10.0
libtpu: 0.0.40
codegen_flags: <defaults>
</compile_context>

<pallas_src>
import math
from functools import partial

import jax
import jax.numpy as jnp
from jax import lax
from jax.experimental import pallas as pl
from jax.experimental.pallas import tpu as pltpu

LANE = 128      # vreg lane width
SUBLANE = 8     # f32 sublane tile
NEG_BIG = -1e30 # bias value for padded vocab lanes


def _round_up(x, m):
    return (x + m - 1) // m * m


def cbow_kernel(idx_ref, emb_ref, w_ref, b_ref, out_ref):
    """One batch-tile of CBOW: gather-sum + linear + log_softmax.

    idx_ref : (TB, C)  int32 token ids
    emb_ref : (Vp, E)  f32 embedding table (vocab padded to 128 lanes)
    w_ref   : (Vp, E)  f32 linear weight (same layout as nn.Linear.weight)
    b_ref   : (1, Vp)  f32 bias, padded lanes = -1e30
    out_ref : (TB, Vp) f32 log-probabilities (padded lanes are garbage/-inf-ish)
    """
    idx = idx_ref[...]                              # (TB, C) int32
    TB, C = idx.shape
    Vp, E = emb_ref.shape

    # counts[b, v] = #{c : idx[b, c] == v}, built as C lane-dense 2-D compares
    # (VPU work) instead of a 3-D one-hot + sublane-strided reduction.
    iota_v = lax.broadcasted_iota(jnp.int32, (TB, Vp), 1)
    counts = jnp.zeros((TB, Vp), jnp.float32)
    for c in range(C):                              # static unroll, C is small
        counts = counts + (idx[:, c:c + 1] == iota_v).astype(jnp.float32)

    # Embedding lookup + sum over the context axis == counts @ emb (MXU).
    summed = jnp.dot(counts, emb_ref[...],
                     preferred_element_type=jnp.float32)          # (TB, E)

    # Linear: contract E against the (Vp, E) weight directly (no transpose).
    logits = lax.dot_general(
        summed, w_ref[...],
        dimension_numbers=(((1,), (1,)), ((), ())),
        preferred_element_type=jnp.float32) + b_ref[...]          # (TB, Vp)

    # Numerically stable log_softmax over the vocab axis. Padded lanes carry
    # bias = -1e30 so exp(shifted) underflows to 0 and they do not perturb
    # the logsumexp of the real lanes.
    m = jnp.max(logits, axis=-1, keepdims=True)
    shifted = logits - m
    lse = jnp.log(jnp.sum(jnp.exp(shifted), axis=-1, keepdims=True))
    out_ref[...] = shifted - lse


def prepare_cbow_params(emb_table, lin_weight, lin_bias):
    """One-time parameter prep: pad the vocab dim to a lane-dense multiple of 128.

    emb_table : (V, E), lin_weight : (V, E)  (torch nn.Linear.weight layout),
    lin_bias  : (V,).
    Returns (emb_p (Vp,E), w_p (Vp,E), b_p (1,Vp), V).
    """
    V, E = emb_table.shape
    Vp = _round_up(V, LANE)
    pad = Vp - V
    emb_p = jnp.pad(emb_table.astype(jnp.float32), ((0, pad), (0, 0)))
    w_p = jnp.pad(lin_weight.astype(jnp.float32), ((0, pad), (0, 0)))
    b_p = jnp.pad(lin_bias.astype(jnp.float32), (0, pad),
                  constant_values=NEG_BIG).reshape(1, Vp)
    return emb_p, w_p, b_p, V


@partial(jax.jit, static_argnames=("vocab_size",))
def cbow_forward(inputs, emb_p, w_p, b_p, *, vocab_size):
    """inputs: (B, C) int32 token ids; params as returned by prepare_cbow_params."""
    B, C = inputs.shape
    Vp, E = emb_p.shape

    # Batch tiling: shard the batch across grid steps (and TensorCores on v7x).
    TB = min(_round_up(B, SUBLANE), 128)
    Bp = _round_up(B, TB)
    idx = inputs if inputs.dtype == jnp.int32 else inputs.astype(jnp.int32)
    if Bp != B:
        idx = jnp.pad(idx, ((0, Bp - B), (0, 0)))   # pad rows use token 0

    flops = 2 * Bp * Vp * E * 2                      # two MXU matmuls
    bytes_accessed = (idx.size * 4 + emb_p.size * 4 + w_p.size * 4
                      + b_p.size * 4 + Bp * Vp * 4)

    out = pl.pallas_call(
        cbow_kernel,
        out_shape=jax.ShapeDtypeStruct((Bp, Vp), jnp.float32),
        grid=(Bp // TB,),
        in_specs=[
            pl.BlockSpec((TB, C), lambda i: (i, 0)),   # ids: tiled over batch
            pl.BlockSpec((Vp, E), lambda i: (0, 0)),   # emb table: resident
            pl.BlockSpec((Vp, E), lambda i: (0, 0)),   # linear weight: resident
            pl.BlockSpec((1, Vp), lambda i: (0, 0)),   # bias: resident
        ],
        out_specs=pl.BlockSpec((TB, Vp), lambda i: (i, 0)),
        compiler_params=pltpu.CompilerParams(
            dimension_semantics=("parallel",)),
        cost_estimate=pl.CostEstimate(
            flops=flops,
            transcendentals=Bp * Vp + Bp,            # exps + logs
            bytes_accessed=bytes_accessed),
    )(idx, emb_p, w_p, b_p)

    # Slice off batch/vocab padding (tiny copy; keeps the kernel lane-dense).
    return out[:B, :vocab_size]


def reference_forward(inputs, emb_table, lin_weight, lin_bias):
    embeds = emb_table[inputs]                        # (B, C, E)
    summed = embeds.sum(axis=-2)                      # (B, E)
    out = summed @ lin_weight.T + lin_bias            # (B, V)
    return jax.nn.log_softmax(out, axis=-1)


if __name__ == "__main__":
    # Small synthetic hyperparameters consistent with the module:
    #   vocab_size -> 64, embedding_dim -> 32, context_size -> 2
    VOCAB_SIZE = 64
    EMBEDDING_DIM = 32
    CONTEXT_SIZE = 2
    BATCH = 8
    CONTEXT_WINDOW = 2 * CONTEXT_SIZE   # tokens per example

    key = jax.random.PRNGKey(0)
    k_emb, k_w, k_b, k_idx = jax.random.split(key, 4)

    # torch.nn.Embedding init: N(0, 1)
    emb_table = jax.random.normal(k_emb, (VOCAB_SIZE, EMBEDDING_DIM),
                                  dtype=jnp.float32)
    # torch.nn.Linear init: U(-1/sqrt(in_features), 1/sqrt(in_features))
    bound = 1.0 / math.sqrt(EMBEDDING_DIM)
    lin_weight = jax.random.uniform(k_w, (VOCAB_SIZE, EMBEDDING_DIM),
                                    minval=-bound, maxval=bound,
                                    dtype=jnp.float32)
    lin_bias = jax.random.uniform(k_b, (VOCAB_SIZE,),
                                  minval=-bound, maxval=bound,
                                  dtype=jnp.float32)

    inputs = jax.random.randint(k_idx, (BATCH, CONTEXT_WINDOW), 0, VOCAB_SIZE,
                                dtype=jnp.int32)

    # One-time param prep (vocab padding to 128 lanes); reused across calls.
    emb_p, w_p, b_p, V = prepare_cbow_params(emb_table, lin_weight, lin_bias)

    log_probs = cbow_forward(inputs, emb_p, w_p, b_p, vocab_size=V)
    log_probs = jax.block_until_ready(log_probs)

    ref = reference_forward(inputs, emb_table, lin_weight, lin_bias)
    assert log_probs.shape == (BATCH, VOCAB_SIZE)
    assert jnp.allclose(log_probs, ref, atol=1e-5, rtol=1e-5), "mismatch vs reference"

    print("KERNEL_OK")
</pallas_src>

<mosaic_0001>
module attributes {stable_mosaic.version = 11 : i64} {
  func.func @cbow_kernel(%arg0: i32, %arg1: memref<8x4xi32, #tpu.memory_space<vmem>>, %arg2: memref<128x32xf32, #tpu.memory_space<vmem>>, %arg3: memref<128x32xf32, #tpu.memory_space<vmem>>, %arg4: memref<1x128xf32, #tpu.memory_space<vmem>>, %arg5: memref<8x128xf32, #tpu.memory_space<vmem>>) attributes {dimension_semantics = [#tpu.dimension_semantics<parallel>], iteration_bounds = array<i64: 1>, scalar_prefetch = 0 : i64, scratch_operands = 0 : i64, tpu.core_type = #tpu.core_type<tc>, window_params = [{transform_indices = @transform_0, window_bounds = array<i64: 8, 4>}, {pipeline_mode = #tpu.pipeline_mode<synchronous>, transform_indices = @transform_1, window_bounds = array<i64: 128, 32>}, {pipeline_mode = #tpu.pipeline_mode<synchronous>, transform_indices = @transform_2, window_bounds = array<i64: 128, 32>}, {pipeline_mode = #tpu.pipeline_mode<synchronous>, transform_indices = @transform_3, window_bounds = array<i64: 1, 128>}, {transform_indices = @transform_4, window_bounds = array<i64: 8, 128>}]} {
    %c0 = arith.constant 0 : index
    %c0_0 = arith.constant 0 : index
    %0 = vector.load %arg1[%c0, %c0_0] : memref<8x4xi32, #tpu.memory_space<vmem>>, vector<8x4xi32>
    %1 = tpu.iota {dimensions = array<i32: 1>} : vector<8x128xi32>
    %cst = arith.constant 0.000000e+00 : f32
    %2 = vector.broadcast %cst : f32 to vector<8x128xf32>
    %3 = vector.extract_strided_slice %0 {offsets = [0, 0], sizes = [8, 1], strides = [1, 1]} : vector<8x4xi32> to vector<8x1xi32>
    %4 = vector.broadcast %3 : vector<8x1xi32> to vector<8x128xi32>
    %5 = arith.cmpi eq, %4, %1 : vector<8x128xi32>
    %6 = arith.extui %5 : vector<8x128xi1> to vector<8x128xi32>
    %7 = arith.sitofp %6 : vector<8x128xi32> to vector<8x128xf32>
    %8 = arith.addf %2, %7 : vector<8x128xf32>
    %9 = vector.extract_strided_slice %0 {offsets = [0, 1], sizes = [8, 1], strides = [1, 1]} : vector<8x4xi32> to vector<8x1xi32>
    %10 = vector.broadcast %9 : vector<8x1xi32> to vector<8x128xi32>
    %11 = arith.cmpi eq, %10, %1 : vector<8x128xi32>
    %12 = arith.extui %11 : vector<8x128xi1> to vector<8x128xi32>
    %13 = arith.sitofp %12 : vector<8x128xi32> to vector<8x128xf32>
    %14 = arith.addf %8, %13 : vector<8x128xf32>
    %15 = vector.extract_strided_slice %0 {offsets = [0, 2], sizes = [8, 1], strides = [1, 1]} : vector<8x4xi32> to vector<8x1xi32>
    %16 = vector.broadcast %15 : vector<8x1xi32> to vector<8x128xi32>
    %17 = arith.cmpi eq, %16, %1 : vector<8x128xi32>
    %18 = arith.extui %17 : vector<8x128xi1> to vector<8x128xi32>
    %19 = arith.sitofp %18 : vector<8x128xi32> to vector<8x128xf32>
    %20 = arith.addf %14, %19 : vector<8x128xf32>
    %21 = vector.extract_strided_slice %0 {offsets = [0, 3], sizes = [8, 1], strides = [1, 1]} : vector<8x4xi32> to vector<8x1xi32>
    %22 = vector.broadcast %21 : vector<8x1xi32> to vector<8x128xi32>
    %23 = arith.cmpi eq, %22, %1 : vector<8x128xi32>
    %24 = arith.extui %23 : vector<8x128xi1> to vector<8x128xi32>
    %25 = arith.sitofp %24 : vector<8x128xi32> to vector<8x128xf32>
    %26 = arith.addf %20, %25 : vector<8x128xf32>
    %c0_1 = arith.constant 0 : index
    %c0_2 = arith.constant 0 : index
    %27 = vector.load %arg2[%c0_1, %c0_2] : memref<128x32xf32, #tpu.memory_space<vmem>>, vector<128x32xf32>
    %cst_3 = arith.constant dense<0.000000e+00> : vector<8x32xf32>
    %28 = tpu.matmul %26, %27, %cst_3 {dimension_numbers = #tpu.dot_dimension_numbers<[1], [0], [0], [1], [0, 0, 1, 1], [], []>} : vector<8x128xf32>, vector<128x32xf32>, vector<8x32xf32> -> vector<8x32xf32>
    %c0_4 = arith.constant 0 : index
    %c0_5 = arith.constant 0 : index
    %29 = vector.load %arg3[%c0_4, %c0_5] : memref<128x32xf32, #tpu.memory_space<vmem>>, vector<128x32xf32>
    %cst_6 = arith.constant dense<0.000000e+00> : vector<8x128xf32>
    %30 = tpu.matmul %28, %29, %cst_6 {dimension_numbers = #tpu.dot_dimension_numbers<[1], [1], [0], [0], [0, 0, 1, 0], [], []>} : vector<8x32xf32>, vector<128x32xf32>, vector<8x128xf32> -> vector<8x128xf32>
    %c0_7 = arith.constant 0 : index
    %c0_8 = arith.constant 0 : index
    %31 = vector.load %arg4[%c0_7, %c0_8] : memref<1x128xf32, #tpu.memory_space<vmem>>, vector<1x128xf32>
    %32 = vector.broadcast %31 : vector<1x128xf32> to vector<8x128xf32>
    %33 = arith.addf %30, %32 : vector<8x128xf32>
    %cst_9 = arith.constant dense<0xFF800000> : vector<8xf32>
    %34 = vector.multi_reduction <maximumf>, %33, %cst_9 [1] : vector<8x128xf32> to vector<8xf32>
    %35 = vector.shape_cast %34 : vector<8xf32> to vector<8x1xf32>
    %36 = vector.broadcast %35 : vector<8x1xf32> to vector<8x128xf32>
    %37 = arith.subf %33, %36 : vector<8x128xf32>
    %38 = math.exp %37 : vector<8x128xf32>
    %cst_10 = arith.constant dense<0.000000e+00> : vector<8xf32>
    %39 = vector.multi_reduction <add>, %38, %cst_10 [1] : vector<8x128xf32> to vector<8xf32>
    %40 = vector.shape_cast %39 : vector<8xf32> to vector<8x1xf32>
    %41 = math.log %40 : vector<8x1xf32>
    %42 = vector.broadcast %41 : vector<8x1xf32> to vector<8x128xf32>
    %43 = arith.subf %37, %42 : vector<8x128xf32>
    %c0_11 = arith.constant 0 : index
    %c0_12 = arith.constant 0 : index
    %44 = vector.load %arg5[%c0_11, %c0_12] : memref<8x128xf32, #tpu.memory_space<vmem>>, vector<8x128xf32>
    tpu.vector_store %arg5[%c0_11, %c0_12], %43 {strides = array<i32>} : memref<8x128xf32, #tpu.memory_space<vmem>>, vector<8x128xf32>,
    return
  }
  func.func @transform_0(%arg0: i32) -> (i32, i32) {
    %c0_i32 = arith.constant 0 : i32
    %c0_i32_0 = arith.constant 0 : i32
    return %arg0, %c0_i32 : i32, i32
  }
  func.func @transform_1(%arg0: i32) -> (i32, i32) {
    %c0_i32 = arith.constant 0 : i32
    %c0_i32_0 = arith.constant 0 : i32
    %c0_i32_1 = arith.constant 0 : i32
    return %c0_i32, %c0_i32_0 : i32, i32
  }
  func.func @transform_2(%arg0: i32) -> (i32, i32) {
    %c0_i32 = arith.constant 0 : i32
    %c0_i32_0 = arith.constant 0 : i32
    %c0_i32_1 = arith.constant 0 : i32
    return %c0_i32, %c0_i32_0 : i32, i32
  }
  func.func @transform_3(%arg0: i32) -> (i32, i32) {
    %c0_i32 = arith.constant 0 : i32
    %c0_i32_0 = arith.constant 0 : i32
    %c0_i32_1 = arith.constant 0 : i32
    return %c0_i32, %c0_i32_0 : i32, i32
  }
  func.func @transform_4(%arg0: i32) -> (i32, i32) {
    %c0_i32 = arith.constant 0 : i32
    %c0_i32_0 = arith.constant 0 : i32
    return %arg0, %c0_i32 : i32, i32
  }
}

</mosaic_0001>

<llo_original>
// kernel: cbow_forward.1
$region0: #{cbow_forward.1}
  #allocation0 [shape = 'u32[]', space=smem, size = 0x4, offset = 0x4, fixed_abs, tag = 'smem constant byte address 0x4 - core index']
  #allocation1 [shape = 'u32[144,128]{1,0:T(1,128)}', space=vmem, size = 0x12000, scoped, tag = 'internal scratch']
  %s0 = inlined_call_operand.vmem [shape: s32[8,4], index: 0, kind: input, shape index: {}]
  %s1 = inlined_call_operand.vmem [shape: f32[128,32], index: 1, kind: input, shape index: {}]
  %s2 = inlined_call_operand.vmem [shape: f32[128,32], index: 2, kind: input, shape index: {}]
  %s3 = inlined_call_operand.vmem [shape: f32[1,128], index: 3, kind: input, shape index: {}]
  %s4 = inlined_call_operand.hbm [shape: f32[8,128], index: 4, kind: output, shape index: {}]
  %s5 = sld [smem:[#allocation0]]
  $region26: #{cbow_forward.1} parent=0
    _
  %s7 = ssub.s32 1, %s5
  %s8 = scalar_select 0, %s7, %s5
  $region1: #{cbow_forward.1} parent=0
    #allocation2 [shape = 'u8[4096]{0}', space=vmem, size = 0x1000, scoped, tag = 'output window, operand 0, single buffered']
    #allocation3 [shape = 's32[1]{0}', space=sflag, size = 0x4, scoped, tag = 'scoped memory for cbow_forward.1']
    %9 = vsyncpa [#allocation3], 0
    // Predicated region
    $region2: #{cbow_forward.1} parent=1 // pred_check
      _
    $region3: #{cbow_forward.1} parent=1 // pred_check_branch
      %11 = sbr.rel (0) target = $region5
    $region4: #{cbow_forward.1} parent=1 // pred_region
      _
    $region5: #{cbow_forward.1} parent=1 // pred_fallthru
      _
    // Predicated region
    $region6: #{cbow_forward.1} parent=1 // pred_check
      _
    $region7: #{cbow_forward.1} parent=1 // pred_check_branch
      %13 = sbr.rel (0) target = $region9
    $region8: #{cbow_forward.1} parent=1 // pred_region
      _
    $region9: #{cbow_forward.1} parent=1 // pred_fallthru
      _
    // Predicated region
    $region10: #{cbow_forward.1} parent=1 // pred_check
      _
    $region11: #{cbow_forward.1} parent=1 // pred_check_branch
      %15 = sbr.rel (0) target = $region13
    $region12: #{cbow_forward.1} parent=1 // pred_region
      _
    $region13: #{cbow_forward.1} parent=1 // pred_fallthru
      _
    // Predicated region
    $region14: #{cbow_forward.1} parent=1 // pred_check
      _
    $region15: #{cbow_forward.1} parent=1 // pred_check_branch
      %17 = sbr.rel (0) target = $region17
    $region16: #{cbow_forward.1} parent=1 // pred_region
      _
    $region17: #{cbow_forward.1} parent=1 // pred_fallthru
      _
    %v18 = vld [vmem:[%s0] sm:$0xff]
    %v19 = vlaneseq
    %v20 = vand.u32 %v19, 127
    %21 = vset.pattern.permute.xlu0 0
    %22 = vperm.xlu0 %21, %v18
    %v23 = vpop.permute.xlu0 %22
    %vm24 = vcmp.eq.s32.totalorder %v23, %v20
    %v25 = vsel %vm24, 1, 0
    %v26 = vcvt.s32.f32 %v25
    %v27 = vadd.f32 %v26, 0.0
    %28 = vset.pattern.permute.xlu0 1
    %29 = vperm.xlu0 %28, %v18
    %v30 = vpop.permute.xlu0 %29
    %vm31 = vcmp.eq.s32.totalorder %v30, %v20
    %v32 = vsel %vm31, 1, 0
    %v33 = vcvt.s32.f32 %v32
    %v34 = vadd.f32 %v27, %v33
    %35 = vset.pattern.permute.xlu0 2
    %36 = vperm.xlu0 %35, %v18
    %v37 = vpop.permute.xlu0 %36
    %vm38 = vcmp.eq.s32.totalorder %v37, %v20
    %v39 = vsel %vm38, 1, 0
    %v40 = vcvt.s32.f32 %v39
    %v41 = vadd.f32 %v34, %v40
    %42 = vset.pattern.permute.xlu0 3
    %43 = vperm.xlu0 %42, %v18
    %v44 = vpop.permute.xlu0 %43
    %vm45 = vcmp.eq.s32.totalorder %v44, %v20
    %v46 = vsel %vm45, 1, 0
    %v47 = vcvt.s32.f32 %v46
    %v48 = vadd.f32 %v41, %v47
    %v49 = vld [vmem:[%s1] sm:$0xff]
    %v50 = vld [vmem:[%s1 + $0x8] sm:$0xff]
    %v51 = vld [vmem:[%s1 + $0x10] sm:$0xff]
    %v52 = vld [vmem:[%s1 + $0x18] sm:$0xff]
    %v53 = vld [vmem:[%s1 + $0x20] sm:$0xff]
    %v54 = vld [vmem:[%s1 + $0x28] sm:$0xff]
    %v55 = vld [vmem:[%s1 + $0x30] sm:$0xff]
    %v56 = vld [vmem:[%s1 + $0x38] sm:$0xff]
    %v57 = vld [vmem:[%s1 + $0x40] sm:$0xff]
    %v58 = vld [vmem:[%s1 + $0x48] sm:$0xff]
    %v59 = vld [vmem:[%s1 + $0x50] sm:$0xff]
    %v60 = vld [vmem:[%s1 + $0x58] sm:$0xff]
    %v61 = vld [vmem:[%s1 + $0x60] sm:$0xff]
    %v62 = vld [vmem:[%s1 + $0x68] sm:$0xff]
    %v63 = vld [vmem:[%s1 + $0x70] sm:$0xff]
    %v64 = vld [vmem:[%s1 + $0x78] sm:$0xff]
    %65 = vmatprep.subr.mxu0 0.0
    %66 = vmatpush1.msra.mxu0 %v49
    %67 = vmatprep.subr.mxu0 0.0
    %68 = vmatpush1.msra.mxu0 %v50
    %69 = vmatprep.subr.mxu0 0.0
    %70 = vmatpush1.msra.mxu0 %v51
    %71 = vmatprep.subr.mxu0 0.0
    %72 = vmatpush1.msra.mxu0 %v52
    %73 = vmatprep.subr.mxu0 0.0
    %74 = vmatpush1.msra.mxu0 %v53
    %75 = vmatprep.subr.mxu0 0.0
    %76 = vmatpush1.msra.mxu0 %v54
    %77 = vmatprep.subr.mxu0 0.0
    %78 = vmatpush1.msra.mxu0 %v55
    %79 = vmatprep.subr.mxu0 0.0
    %80 = vmatpush1.msra.mxu0 %v56
    %81 = vmatprep.subr.mxu0 0.0
    %82 = vmatpush1.msra.mxu0 %v57
    %83 = vmatprep.subr.mxu0 0.0
    %84 = vmatpush1.msra.mxu0 %v58
    %85 = vmatprep.subr.mxu0 0.0
    %86 = vmatpush1.msra.mxu0 %v59
    %87 = vmatprep.subr.mxu0 0.0
    %88 = vmatpush1.msra.mxu0 %v60
    %89 = vmatprep.subr.mxu0 0.0
    %90 = vmatpush1.msra.mxu0 %v61
    %91 = vmatprep.subr.mxu0 0.0
    %92 = vmatpush1.msra.mxu0 %v62
    %93 = vmatprep.subr.mxu0 0.0
    %94 = vmatpush1.msra.mxu0 %v63
    %95 = vmatprep.subr.mxu0 0.0
    %96 = vmatpush1.msra.mxu0 %v64
    %97 = vmatprep.subr.mxu0 0.0
    %98 = vmatpush1.msra.mxu0 0.0
    %99 = vmatprep.subr.mxu0 0.0
    %100 = vmatpush1.msra.mxu0 0.0
    %101 = vmatprep.subr.mxu0 0.0
    %102 = vmatpush1.msra.mxu0 0.0
    %103 = vmatprep.subr.mxu0 0.0
    %104 = vmatpush1.msra.mxu0 0.0
    %105 = vmatprep.subr.mxu0 0.0
    %106 = vmatpush1.msra.mxu0 0.0
    %107 = vmatprep.subr.mxu0 0.0
    %108 = vmatpush1.msra.mxu0 0.0
    %109 = vmatprep.subr.mxu0 0.0
    %110 = vmatpush1.msra.mxu0 0.0
    %111 = vmatprep.subr.mxu0 0.0
    %112 = vmatpush1.msra.mxu0 0.0
    %113 = vmatprep.subr.mxu0 0.0
    %114 = vmatpush1.msra.mxu0 0.0
    %115 = vmatprep.subr.mxu0 0.0
    %116 = vmatpush1.msra.mxu0 0.0
    %117 = vmatprep.subr.mxu0 0.0
    %118 = vmatpush1.msra.mxu0 0.0
    %119 = vmatprep.subr.mxu0 0.0
    %120 = vmatpush1.msra.mxu0 0.0
    %121 = vmatprep.subr.mxu0 0.0
    %122 = vmatpush1.msra.mxu0 0.0
    %123 = vmatprep.subr.mxu0 0.0
    %124 = vmatpush1.msra.mxu0 0.0
    %125 = vmatprep.subr.mxu0 0.0
    %126 = vmatpush1.msra.mxu0 0.0
    %127 = vmatprep.subr.mxu0 0.0
    %128 = vmatpush1.msra.mxu0 0.0
    %129 = vmatprep.mubr.f32.mxu0 0.0
    %130 = vmatmul.mubr.f32.gmra.mrb[0].mxu0 %v48
    %v131 = vpop.f32.mrb[0].mxu0
    %v132 = vadd.f32 0.0, %v131
    %v133 = vpop.f32.mrb[0].mxu0
    %134 = vdwg.mxu0
    %v135 = vld [vmem:[%s2] sm:$0xff]
    %v136 = vld [vmem:[%s2 + $0x8] sm:$0xff]
    %v137 = vld [vmem:[%s2 + $0x10] sm:$0xff]
    %v138 = vld [vmem:[%s2 + $0x18] sm:$0xff]
    %v139 = vld [vmem:[%s2 + $0x20] sm:$0xff]
    %v140 = vld [vmem:[%s2 + $0x28] sm:$0xff]
    %v141 = vld [vmem:[%s2 + $0x30] sm:$0xff]
    %v142 = vld [vmem:[%s2 + $0x38] sm:$0xff]
    %v143 = vld [vmem:[%s2 + $0x40] sm:$0xff]
    %v144 = vld [vmem:[%s2 + $0x48] sm:$0xff]
    %v145 = vld [vmem:[%s2 + $0x50] sm:$0xff]
    %v146 = vld [vmem:[%s2 + $0x58] sm:$0xff]
    %v147 = vld [vmem:[%s2 + $0x60] sm:$0xff]
    %v148 = vld [vmem:[%s2 + $0x68] sm:$0xff]
    %v149 = vld [vmem:[%s2 + $0x70] sm:$0xff]
    %v150 = vld [vmem:[%s2 + $0x78] sm:$0xff]
    %v151 = vld [vmem:[%s3] sm:$0x1]
    %v153 = vlaneseq
    %v154 = vshrl.u32 %v153, 7
    %v155 = vsub.s32 0, %v154
    %v156 = vrot.slane %v151, %v155
    %vm158 = vcmask 261120
    %v160 = vsel %vm158, %v132, 0
    %v163 = vsel %vm158, %v135, 0
    %v166 = vsel %vm158, %v136, 0
    %v169 = vsel %vm158, %v137, 0
    %v172 = vsel %vm158, %v138, 0
    %v175 = vsel %vm158, %v139, 0
    %v178 = vsel %vm158, %v140, 0
    %v181 = vsel %vm158, %v141, 0
    %v184 = vsel %vm158, %v142, 0
    %v187 = vsel %vm158, %v143, 0
    %v190 = vsel %vm158, %v144, 0
    %v193 = vsel %vm158, %v145, 0
    %v196 = vsel %vm158, %v146, 0
    %v199 = vsel %vm158, %v147, 0
    %v202 = vsel %vm158, %v148, 0
    %v205 = vsel %vm158, %v149, 0
    %v208 = vsel %vm158, %v150, 0
    %210 = vmatprep.subr.mxu0 0.0
    %211 = vmatpush1.xpose.msra.mxu0 %v163
    %212 = vmatprep.subr.mxu0 0.0
    %213 = vmatpush1.xpose.msra.mxu0 %v166
    %214 = vmatprep.subr.mxu0 0.0
    %215 = vmatpush1.xpose.msra.mxu0 %v169
    %216 = vmatprep.subr.mxu0 0.0
    %217 = vmatpush1.xpose.msra.mxu0 %v172
    %218 = vmatprep.subr.mxu0 0.0
    %219 = vmatpush1.xpose.msra.mxu0 %v175
    %220 = vmatprep.subr.mxu0 0.0
    %221 = vmatpush1.xpose.msra.mxu0 %v178
    %222 = vmatprep.subr.mxu0 0.0
    %223 = vmatpush1.xpose.msra.mxu0 %v181
    %224 = vmatprep.subr.mxu0 0.0
    %225 = vmatpush1.xpose.msra.mxu0 %v184
    %226 = vmatprep.subr.mxu0 0.0
    %227 = vmatpush1.xpose.msra.mxu0 %v187
    %228 = vmatprep.subr.mxu0 0.0
    %229 = vmatpush1.xpose.msra.mxu0 %v190
    %230 = vmatprep.subr.mxu0 0.0
    %231 = vmatpush1.xpose.msra.mxu0 %v193
    %232 = vmatprep.subr.mxu0 0.0
    %233 = vmatpush1.xpose.msra.mxu0 %v196
    %234 = vmatprep.subr.mxu0 0.0
    %235 = vmatpush1.xpose.msra.mxu0 %v199
    %236 = vmatprep.subr.mxu0 0.0
    %237 = vmatpush1.xpose.msra.mxu0 %v202
    %238 = vmatprep.subr.mxu0 0.0
    %239 = vmatpush1.xpose.msra.mxu0 %v205
    %240 = vmatprep.subr.mxu0 0.0
    %241 = vmatpush1.xpose.msra.mxu0 %v208
    %242 = vmatprep.subr.mxu0 0.0
    %243 = vmatpush1.xpose.msra.mxu0 0.0
    %244 = vmatprep.subr.mxu0 0.0
    %245 = vmatpush1.xpose.msra.mxu0 0.0
    %246 = vmatprep.subr.mxu0 0.0
    %247 = vmatpush1.xpose.msra.mxu0 0.0
    %248 = vmatprep.subr.mxu0 0.0
    %249 = vmatpush1.xpose.msra.mxu0 0.0
    %250 = vmatprep.subr.mxu0 0.0
    %251 = vmatpush1.xpose.msra.mxu0 0.0
    %252 = vmatprep.subr.mxu0 0.0
    %253 = vmatpush1.xpose.msra.mxu0 0.0
    %254 = vmatprep.subr.mxu0 0.0
    %255 = vmatpush1.xpose.msra.mxu0 0.0
    %256 = vmatprep.subr.mxu0 0.0
    %257 = vmatpush1.xpose.msra.mxu0 0.0
    %258 = vmatprep.subr.mxu0 0.0
    %259 = vmatpush1.xpose.msra.mxu0 0.0
    %260 = vmatprep.subr.mxu0 0.0
    %261 = vmatpush1.xpose.msra.mxu0 0.0
    %262 = vmatprep.subr.mxu0 0.0
    %263 = vmatpush1.xpose.msra.mxu0 0.0
    %264 = vmatprep.subr.mxu0 0.0
    %265 = vmatpush1.xpose.msra.mxu0 0.0
    %266 = vmatprep.subr.mxu0 0.0
    %267 = vmatpush1.xpose.msra.mxu0 0.0
    %268 = vmatprep.subr.mxu0 0.0
    %269 = vmatpush1.xpose.msra.mxu0 0.0
    %270 = vmatprep.subr.mxu0 0.0
    %271 = vmatpush1.xpose.msra.mxu0 0.0
    %272 = vmatprep.subr.mxu0 0.0
    %273 = vmatpush1.xpose.msra.mxu0 0.0
    %274 = vmatprep.mubr.f32.mxu0 0.0
    %275 = vmatmul.mubr.f32.gmra.mrb[0].mxu0 %v160
    %v276 = vpop.f32.mrb[0].mxu0
    %v277 = vadd.f32 %v156, %v276
    %v278 = vpop.f32.mrb[0].mxu0
    %279 = vdwg.mxu0
    %280 = vmax.xlane.f32.xlu0 %v277
    %v281 = vpop.xlane.xlu0 %280
    %v282 = vsub.f32 %v277, %v281
    %v283 = vmul.f32 %v282, 1.442695
    %v284 = vpow.pop %v283
    %285 = vadd.xlane.f32.xlu0 %v284
    %v286 = vpop.xlane.xlu0 %285
    %v287 = vlog2.pop %v286
    %v288 = vmul.f32 %v287, 0.6931472
    %v289 = vsub.f32 %v282, %v288
    %290 = vst [vmem:[#allocation2] sm:$0xff] %v289
    // Predicated region
    $region18: #{cbow_forward.1} parent=1 // pred_check
      _
    $region19: #{cbow_forward.1} parent=1 // pred_check_branch
      %292 = sbr.rel (0) target = $region21
    $region20: #{cbow_forward.1} parent=1 // pred_region
      %s294 = ssub.s32 128, 128
      %295 = vsyncadd [#allocation3], %s294
      %s297 = sshll.u32 [#allocation2], 4
      %s298 = int_to_ptr.vmem [resolvable:$true] %s297
      %300 = dma.vmem_to_hbm [thread:$0]  %s298, 128, %s4, [#allocation3]
    $region21: #{cbow_forward.1} parent=1 // pred_fallthru
      _
    // Predicated region
    $region22: #{cbow_forward.1} parent=1 // pred_check
      _
    $region23: #{cbow_forward.1} parent=1 // pred_check_branch
      %302 = sbr.rel (0) target = $region25
    $region24: #{cbow_forward.1} parent=1 // pred_region
      %303 = dma.done [#allocation3], 128
    $region25: #{cbow_forward.1} parent=1 // pred_fallthru
      _
    %304 = vsyncpa [#allocation3], 1

</llo_original>
